<compile_context>
chip_gen: v7x
topology: tpu7x:2x2x1
jax: 0.10.0
libtpu: 0.0.40
codegen_flags: <defaults>
</compile_context>

<pallas_src>
import jax
import jax.numpy as jnp
from jax.experimental import pallas as pl
from jax.experimental.pallas import tpu as pltpu

# ---------------- constants mirroring SingleStageDetector.__init__ ----------------
NUM_ANCHORS = 9
NUM_CLASSES = 20
IN_DIM = 1280                 # MobileNetV2 backbone feature channels
HIDDEN_DIM = 128
FEAT_H = 7
FEAT_W = 7
OUT_CH = 5 * NUM_ANCHORS + NUM_CLASSES   # 65
OUT_PAD = 128                            # lane-dense padded output channels

ANCHOR_LIST = jnp.array(
    [[1.0, 1.0], [2, 2], [3, 3], [4, 4], [5, 5], [2, 3], [3, 2], [3, 5], [5, 3]],
    dtype=jnp.float32)


# =====================================================================================
# Pallas kernels
# =====================================================================================
def _pred_head_kernel(x_ref, w1_ref, b1_ref, w2_ref, b2_ref, o_ref):
    """Prediction head: conv1x1 -> (Dropout2d skipped) -> LeakyReLU -> conv1x1 -> selective sigmoid.

    x is bf16 (TR, IN_DIM); weights bf16; accumulation + epilogue in f32; output (TR, OUT_PAD).
    """
    h = jnp.dot(x_ref[...], w1_ref[...], preferred_element_type=jnp.float32) + b1_ref[...]
    # TODO(synk): nn.Dropout2d(p=0.3) has no deterministic Pallas equivalent; identity (eval mode).
    h = jnp.where(h >= 0.0, h, 0.01 * h)                                  # LeakyReLU(0.01)
    y = jnp.dot(h.astype(jnp.bfloat16), w2_ref[...],
                preferred_element_type=jnp.float32) + b2_ref[...]          # (TR, OUT_PAD)
    sig = 1.0 / (1.0 + jnp.exp(-y))                                        # exact sigmoid

    # Channel masks baked as in-kernel constants (no extra input DMA streams).
    cout = o_ref.shape[1]
    ch = jax.lax.broadcasted_iota(jnp.int32, (1, cout), 1)
    comp = ch % 5
    is_anchor = ch < 5 * NUM_ANCHORS
    cm = jnp.where(is_anchor & (comp == 0), 1.0, 0.0)                      # confidence channels
    tm = jnp.where(is_anchor & ((comp == 1) | (comp == 2)), 1.0, 0.0)      # tx / ty channels

    o_ref[...] = y + cm * (sig - y) + tm * (sig - 0.5 - y)


def pred_head_pallas(x_rows, w1, b1, w2, b2, row_tile):
    """x_rows: (R_pad, IN_DIM) bf16, weights bf16, biases f32 (padded). -> (R_pad, OUT_PAD) f32."""
    R_pad, Cin = x_rows.shape
    Hd = w1.shape[1]
    Cout = w2.shape[1]
    grid = (R_pad // row_tile,)
    return pl.pallas_call(
        _pred_head_kernel,
        out_shape=jax.ShapeDtypeStruct((R_pad, Cout), jnp.float32),
        grid=grid,
        in_specs=[
            pl.BlockSpec((row_tile, Cin), lambda i: (i, 0)),
            pl.BlockSpec((Cin, Hd), lambda i: (0, 0)),
            pl.BlockSpec((1, Hd), lambda i: (0, 0)),
            pl.BlockSpec((Hd, Cout), lambda i: (0, 0)),
            pl.BlockSpec((1, Cout), lambda i: (0, 0)),
        ],
        out_specs=pl.BlockSpec((row_tile, Cout), lambda i: (i, 0)),
        compiler_params=pltpu.CompilerParams(dimension_semantics=("parallel",)),
    )(x_rows, w1, b1, w2, b2)


def _anchor_iou_kernel(geom_ref, box_ref, anc_out_ref, iou_ref):
    """Fused GenerateAnchor + IoU for the whole batch in one grid step.

    geom: (4, AHW_pad) rows = [grid_x, grid_y, anchor_w, anchor_h] (batch-invariant).
    box : (B*N_pad, 5) GT boxes (zero-padded rows).
    anc_out: (4, AHW_pad) = [x_tl, y_tl, x_br, y_br] per anchor column.
    iou    : (B*N_pad, AHW_pad) IoU of every GT-box row vs every anchor column.
    """
    gx = geom_ref[0:1, :]
    gy = geom_ref[1:2, :]
    aw = geom_ref[2:3, :] * 0.5
    ah = geom_ref[3:4, :] * 0.5

    x_tl = gx - aw
    y_tl = gy - ah
    x_br = gx + aw
    y_br = gy + ah
    # Row-sliced stores (no axis-0 concat / sublane re-assembly).
    anc_out_ref[0:1, :] = x_tl
    anc_out_ref[1:2, :] = y_tl
    anc_out_ref[2:3, :] = x_br
    anc_out_ref[3:4, :] = y_br

    bb = box_ref[...]                        # (B*N_pad, 5)
    bx0 = bb[:, 0:1]; by0 = bb[:, 1:2]; bx1 = bb[:, 2:3]; by1 = bb[:, 3:4]

    w_i = jnp.maximum(jnp.minimum(x_br, bx1) - jnp.maximum(x_tl, bx0), 0.0)
    h_i = jnp.maximum(jnp.minimum(y_br, by1) - jnp.maximum(y_tl, by0), 0.0)
    area_i = w_i * h_i
    area_p = (x_br - x_tl) * (y_br - y_tl)   # (1, AHW_pad)  > 0 (padded anchors get w=h=1)
    area_b = (bx1 - bx0) * (by1 - by0)       # (B*N_pad, 1)
    area_u = area_p + area_b - area_i
    # Exact division, matching the reference IoU (no approx-reciprocal bias on matching).
    iou_ref[...] = area_i / area_u


def anchors_and_iou(anc, grid, bboxes):
    """anc: (A,2), grid: (B,H,W,2), bboxes: (B,N,5)
       -> anchors (B,A,H,W,4), iou in the kernel-native (B, N, A*H*W) layout."""
    B, H, W, _ = grid.shape
    A = anc.shape[0]
    HW = H * W
    AHW = A * HW
    AHW_PAD = pl.cdiv(AHW, 128) * 128        # 441 -> 512 : lane-dense stores
    N = bboxes.shape[1]
    N_PAD = pl.cdiv(N, 8) * 8                # sublane multiple

    # Lane layout: l = a*HW + h*W + w  (matches anchors.reshape(A*H*W, 4)); grid/anchors are
    # batch-invariant, so the anchor slab is computed once and broadcast in the wrapper.
    gxy = jnp.transpose(grid[0].reshape(HW, 2), (1, 0))                    # (2, HW)
    gxy = jnp.tile(gxy, (1, A))                                            # (2, AHW)
    anc_rep = jnp.repeat(anc.T, HW, axis=1)                                # (2, AHW)
    geom = jnp.concatenate([gxy, anc_rep], axis=0)                         # (4, AHW)
    # Pad lanes with 1.0 so padded anchor columns have positive area (no div-by-zero).
    geom = jnp.pad(geom, ((0, 0), (0, AHW_PAD - AHW)), constant_values=1.0)

    boxes = jnp.pad(bboxes, ((0, 0), (0, N_PAD - N), (0, 0))).reshape(B * N_PAD, 5)

    anc_out, iou_out = pl.pallas_call(
        _anchor_iou_kernel,
        out_shape=(jax.ShapeDtypeStruct((4, AHW_PAD), jnp.float32),
                   jax.ShapeDtypeStruct((B * N_PAD, AHW_PAD), jnp.float32)),
        grid=(1,),
        in_specs=[
            pl.BlockSpec((4, AHW_PAD), lambda i: (0, 0)),
            pl.BlockSpec((B * N_PAD, 5), lambda i: (0, 0)),
        ],
        out_specs=(pl.BlockSpec((4, AHW_PAD), lambda i: (0, 0)),
                   pl.BlockSpec((B * N_PAD, AHW_PAD), lambda i: (0, 0))),
    )(geom, boxes)

    anchors1 = jnp.transpose(anc_out[:, :AHW], (1, 0)).reshape(A, H, W, 4)
    anchors = jnp.broadcast_to(anchors1[None], (B, A, H, W, 4))
    iou_nat = iou_out.reshape(B, N_PAD, AHW_PAD)[:, :N, :AHW]              # native (B, N, AHW)
    return anchors, iou_nat


# =====================================================================================
# Losses (plain JAX — the SSE reductions are tiny and fuse into neighbours under XLA)
# =====================================================================================
def detection_losses(conf_scores, GT_conf_scores, offsets, GT_offsets):
    target = jnp.concatenate(
        [jnp.ones_like(GT_conf_scores), jnp.zeros_like(GT_conf_scores)], axis=0).reshape(-1, 1)
    conf_loss = jnp.sum((conf_scores - target) ** 2) / target.shape[0]
    reg_loss = jnp.sum((offsets - GT_offsets) ** 2) / GT_offsets.shape[0]
    return conf_loss, reg_loss


def _object_classification_stub(class_scores, GT_class, batch_size):
    # TODO(synk): ObjectClassification was not provided with the module; standard per-image-averaged
    # softmax cross-entropy in plain JAX stands in for it.
    logp = jax.nn.log_softmax(class_scores, axis=-1)
    ce = -jnp.take_along_axis(logp, GT_class[:, None], axis=-1)[:, 0]
    return jnp.mean(jnp.mean(ce.reshape(batch_size, -1), axis=1))


# =====================================================================================
# Plain-JAX glue reproducing the PyTorch module structure
# =====================================================================================
def generate_grid(batch_size, w_amap=FEAT_W, h_amap=FEAT_H):
    # GenerateGrid was not provided; reproduced from the A5 convention (cell centers at +0.5).
    w_range = jnp.arange(w_amap, dtype=jnp.float32) + 0.5
    h_range = jnp.arange(h_amap, dtype=jnp.float32) + 0.5
    wg = jnp.tile(w_range[None, :], (h_amap, 1))
    hg = jnp.tile(h_range[:, None], (1, w_amap))
    grid = jnp.stack([wg, hg], axis=-1)                         # (H, W, 2) = (x, y)
    return jnp.broadcast_to(grid[None], (batch_size, h_amap, w_amap, 2))


def synthetic_features(images, key):
    # TODO(synk): FeatureExtractor (torchvision MobileNetV2 backbone) was not provided; substitute
    # deterministic pseudo-features of the correct shape (B, 1280, 7, 7).
    B = images.shape[0]
    base = jax.random.normal(key, (B, IN_DIM, FEAT_H, FEAT_W), jnp.float32)
    scale = 1.0 + 0.01 * jnp.mean(images, axis=(1, 2, 3)).reshape(B, 1, 1, 1)
    return base * scale


def prediction_network_forward(features, params, pos_anchor_idx, neg_anchor_idx):
    """Training-time PredictionNetwork.forward (returns conf (2M,1), offsets (M,4), class (M,C))."""
    w1, b1, w2, b2 = params
    B, Cin, H, W = features.shape
    A, C = NUM_ANCHORS, NUM_CLASSES

    # Rows in NHWC order, channels on lanes. Fill the 256-wide MXU (v6e/v7x) only when the grid
    # still has >=2 steps (keeps both v7x TensorCores fed at small batch); otherwise 128.
    R = B * H * W
    row_tile = 256 if R > 256 else 128
    R_pad = pl.cdiv(R, row_tile) * row_tile

    # Cast to bf16 BEFORE the relayout (halves transpose/pad bytes).
    x_rows = jnp.transpose(features.astype(jnp.bfloat16), (0, 2, 3, 1)).reshape(R, Cin)
    x_rows = jnp.pad(x_rows, ((0, R_pad - R), (0, 0)))
    w1_b = w1.astype(jnp.bfloat16)
    w2_p = jnp.pad(w2, ((0, 0), (0, OUT_PAD - OUT_CH))).astype(jnp.bfloat16)
    b2_p = jnp.pad(b2, ((0, 0), (0, OUT_PAD - OUT_CH)))

    y = pred_head_pallas(x_rows, w1_b, b1, w2_p, b2_p, row_tile)           # (R_pad, OUT_PAD)
    y_hwc = y[:R, :5 * A + C].reshape(B, H, W, 5 * A + C)                  # strip pad, stay NHWC

    # Anchor data straight into the (B, A, H, W, D) gather layout (no NCHW round-trip).
    anc_dat = jnp.transpose(y_hwc[..., :5 * A].reshape(B, H, W, A, 5), (0, 3, 1, 2, 4))
    anc_flat = anc_dat.reshape(B * A * H * W, 5)
    conf_flat = anc_flat[:, 0:1]               # sigmoid already applied in-kernel
    off_flat = anc_flat[:, 1:5]                # sigmoid - 0.5 already applied to (tx, ty)
    conf_scores = jnp.concatenate([conf_flat[pos_anchor_idx], conf_flat[neg_anchor_idx]], axis=0)
    offsets = off_flat[pos_anchor_idx]

    # Class scores are already (B, H, W, C); broadcast across anchors and gather.
    cs = jnp.broadcast_to(y_hwc[..., 5 * A:][:, None], (B, A, H, W, C)).reshape(B * A * H * W, C)
    class_scores = cs[pos_anchor_idx]
    return conf_scores, offsets, class_scores


def _simplified_anchor_matching(anchors, bboxes, iou_nat):
    # TODO(synk): ReferenceOnActivatedAnchors was not provided; simplified deterministic argmax /
    # lowest-IoU matching stands in for it to produce pos/neg indices and GT targets.
    # iou_nat is consumed in the kernel-native (B, N, AHW) layout (reference layout is (B, AHW, N)).
    B, A, H, W, _ = anchors.shape
    N = bboxes.shape[1]
    AHW = A * H * W
    b_idx = jnp.arange(B)[:, None]
    best = jnp.argmax(iou_nat, axis=2)                                  # (B, N) best anchor per GT
    pos_idx = (b_idx * AHW + best).reshape(-1).astype(jnp.int32)
    max_iou = jnp.max(iou_nat, axis=1)                                  # (B, AHW)
    neg_local = jnp.argsort(max_iou, axis=1)[:, :N]
    neg_idx = (b_idx * AHW + neg_local).reshape(-1).astype(jnp.int32)
    GT_conf = jnp.take_along_axis(iou_nat, best[:, :, None], axis=2)[..., 0].reshape(-1, 1)
    anc_flat = anchors.reshape(B, AHW, 4)
    pos_anc = anc_flat[b_idx, best]                                     # (B, N, 4)
    gt_box = bboxes[..., :4]
    anc_c = 0.5 * (pos_anc[..., :2] + pos_anc[..., 2:4])
    anc_wh = jnp.maximum(pos_anc[..., 2:4] - pos_anc[..., :2], 1e-6)
    gt_c = 0.5 * (gt_box[..., :2] + gt_box[..., 2:4])
    gt_wh = jnp.maximum(gt_box[..., 2:4] - gt_box[..., :2], 1e-6)
    GT_offsets = jnp.concatenate([gt_c - anc_c, jnp.log(gt_wh / anc_wh)], axis=-1).reshape(-1, 4)
    GT_class = bboxes[..., 4].astype(jnp.int32).reshape(-1)
    return pos_idx, neg_idx, GT_conf, GT_offsets, GT_class


def single_stage_detector_forward(images, bboxes, params, feat_key):
    """Training-time SingleStageDetector.forward -> scalar total loss."""
    w_conf, w_reg, w_cls = 1.0, 1.0, 1.0
    B = images.shape[0]

    features = synthetic_features(images, feat_key)             # (B, 1280, 7, 7) NCHW
    grid = generate_grid(B)                                     # (B, 7, 7, 2)
    anchors, iou_nat = anchors_and_iou(ANCHOR_LIST, grid, bboxes)    # [fused Pallas kernel]

    pos_idx, neg_idx, GT_conf, GT_offsets, GT_class = _simplified_anchor_matching(
        anchors, bboxes, iou_nat)

    conf_scores, offsets, class_scores = prediction_network_forward(
        features, params, pos_idx, neg_idx)                     # [Pallas head]

    conf_loss, reg_loss = detection_losses(conf_scores, GT_conf, offsets, GT_offsets)
    cls_loss = _object_classification_stub(class_scores, GT_class, B)
    return w_conf * conf_loss + w_reg * reg_loss + w_cls * cls_loss


# =====================================================================================
if __name__ == "__main__":
    key = jax.random.PRNGKey(0)
    k_img, k_box, k_cls, k_w1, k_b1, k_w2, k_b2, k_feat = jax.random.split(key, 8)

    B, N = 2, 4
    images = jax.random.normal(k_img, (B, 3, 224, 224), jnp.float32)
    # Synthetic GT boxes in the 7x7 activation-map coordinate frame: (x_tl, y_tl, x_br, y_br, class)
    ctr = jax.random.uniform(k_box, (B, N, 2), minval=1.5, maxval=5.5)
    wh = jax.random.uniform(jax.random.fold_in(k_box, 1), (B, N, 2), minval=0.5, maxval=2.0)
    cls = jax.random.randint(k_cls, (B, N, 1), 0, NUM_CLASSES).astype(jnp.float32)
    bboxes = jnp.concatenate([ctr - wh / 2, ctr + wh / 2, cls], axis=-1)

    # Deterministic init of PredictionNetwork's two 1x1 convs (weights stored matmul-ready).
    w1 = jax.random.normal(k_w1, (IN_DIM, HIDDEN_DIM), jnp.float32) * (1.0 / jnp.sqrt(IN_DIM))
    b1 = jax.random.normal(k_b1, (1, HIDDEN_DIM), jnp.float32) * 0.01
    w2 = jax.random.normal(k_w2, (HIDDEN_DIM, OUT_CH), jnp.float32) * (1.0 / jnp.sqrt(HIDDEN_DIM))
    b2 = jax.random.normal(k_b2, (1, OUT_CH), jnp.float32) * 0.01
    params = (w1, b1, w2, b2)

    total_loss = single_stage_detector_forward(images, bboxes, params, k_feat)
    total_loss = jax.block_until_ready(total_loss)
    assert bool(jnp.isfinite(total_loss)), "total loss is not finite"
    print("KERNEL_OK")
</pallas_src>

<mosaic_0001>
module attributes {stable_mosaic.version = 11 : i64} {
  func.func @_anchor_iou_kernel(%arg0: i32, %arg1: memref<4x512xf32, #tpu.memory_space<vmem>>, %arg2: memref<16x5xf32, #tpu.memory_space<vmem>>, %arg3: memref<4x512xf32, #tpu.memory_space<vmem>>, %arg4: memref<16x512xf32, #tpu.memory_space<vmem>>) attributes {dimension_semantics = [#tpu.dimension_semantics<arbitrary>], iteration_bounds = array<i64: 1>, scalar_prefetch = 0 : i64, scratch_operands = 0 : i64, tpu.core_type = #tpu.core_type<tc>, window_params = [{pipeline_mode = #tpu.pipeline_mode<synchronous>, transform_indices = @transform_0, window_bounds = array<i64: 4, 512>}, {pipeline_mode = #tpu.pipeline_mode<synchronous>, transform_indices = @transform_1, window_bounds = array<i64: 16, 5>}, {pipeline_mode = #tpu.pipeline_mode<synchronous>, transform_indices = @transform_2, window_bounds = array<i64: 4, 512>}, {pipeline_mode = #tpu.pipeline_mode<synchronous>, transform_indices = @transform_3, window_bounds = array<i64: 16, 512>}]} {
    %c0 = arith.constant 0 : index
    %c0_0 = arith.constant 0 : index
    %0 = vector.load %arg1[%c0, %c0_0] : memref<4x512xf32, #tpu.memory_space<vmem>>, vector<1x512xf32>
    %c1 = arith.constant 1 : index
    %c0_1 = arith.constant 0 : index
    %1 = vector.load %arg1[%c1, %c0_1] : memref<4x512xf32, #tpu.memory_space<vmem>>, vector<1x512xf32>
    %c2 = arith.constant 2 : index
    %c0_2 = arith.constant 0 : index
    %2 = vector.load %arg1[%c2, %c0_2] : memref<4x512xf32, #tpu.memory_space<vmem>>, vector<1x512xf32>
    %cst = arith.constant 5.000000e-01 : f32
    %3 = vector.broadcast %cst : f32 to vector<1x512xf32>
    %4 = arith.mulf %2, %3 : vector<1x512xf32>
    %c3 = arith.constant 3 : index
    %c0_3 = arith.constant 0 : index
    %5 = vector.load %arg1[%c3, %c0_3] : memref<4x512xf32, #tpu.memory_space<vmem>>, vector<1x512xf32>
    %cst_4 = arith.constant 5.000000e-01 : f32
    %6 = vector.broadcast %cst_4 : f32 to vector<1x512xf32>
    %7 = arith.mulf %5, %6 : vector<1x512xf32>
    %8 = arith.subf %0, %4 : vector<1x512xf32>
    %9 = arith.subf %1, %7 : vector<1x512xf32>
    %10 = arith.addf %0, %4 : vector<1x512xf32>
    %11 = arith.addf %1, %7 : vector<1x512xf32>
    %c0_5 = arith.constant 0 : index
    %c0_6 = arith.constant 0 : index
    %12 = vector.load %arg3[%c0_5, %c0_6] : memref<4x512xf32, #tpu.memory_space<vmem>>, vector<1x512xf32>
    tpu.vector_store %arg3[%c0_5, %c0_6], %8 {strides = array<i32>} : memref<4x512xf32, #tpu.memory_space<vmem>>, vector<1x512xf32>,
    %c1_7 = arith.constant 1 : index
    %c0_8 = arith.constant 0 : index
    %13 = vector.load %arg3[%c1_7, %c0_8] : memref<4x512xf32, #tpu.memory_space<vmem>>, vector<1x512xf32>
    tpu.vector_store %arg3[%c1_7, %c0_8], %9 {strides = array<i32>} : memref<4x512xf32, #tpu.memory_space<vmem>>, vector<1x512xf32>,
    %c2_9 = arith.constant 2 : index
    %c0_10 = arith.constant 0 : index
    %14 = vector.load %arg3[%c2_9, %c0_10] : memref<4x512xf32, #tpu.memory_space<vmem>>, vector<1x512xf32>
    tpu.vector_store %arg3[%c2_9, %c0_10], %10 {strides = array<i32>} : memref<4x512xf32, #tpu.memory_space<vmem>>, vector<1x512xf32>,
    %c3_11 = arith.constant 3 : index
    %c0_12 = arith.constant 0 : index
    %15 = vector.load %arg3[%c3_11, %c0_12] : memref<4x512xf32, #tpu.memory_space<vmem>>, vector<1x512xf32>
    tpu.vector_store %arg3[%c3_11, %c0_12], %11 {strides = array<i32>} : memref<4x512xf32, #tpu.memory_space<vmem>>, vector<1x512xf32>,
    %c0_13 = arith.constant 0 : index
    %c0_14 = arith.constant 0 : index
    %16 = vector.load %arg2[%c0_13, %c0_14] : memref<16x5xf32, #tpu.memory_space<vmem>>, vector<16x5xf32>
    %17 = vector.extract_strided_slice %16 {offsets = [0, 0], sizes = [16, 1], strides = [1, 1]} : vector<16x5xf32> to vector<16x1xf32>
    %18 = vector.extract_strided_slice %16 {offsets = [0, 1], sizes = [16, 1], strides = [1, 1]} : vector<16x5xf32> to vector<16x1xf32>
    %19 = vector.extract_strided_slice %16 {offsets = [0, 2], sizes = [16, 1], strides = [1, 1]} : vector<16x5xf32> to vector<16x1xf32>
    %20 = vector.extract_strided_slice %16 {offsets = [0, 3], sizes = [16, 1], strides = [1, 1]} : vector<16x5xf32> to vector<16x1xf32>
    %21 = vector.broadcast %10 : vector<1x512xf32> to vector<16x512xf32>
    %22 = vector.broadcast %19 : vector<16x1xf32> to vector<16x512xf32>
    %23 = arith.minimumf %21, %22 : vector<16x512xf32>
    %24 = vector.broadcast %8 : vector<1x512xf32> to vector<16x512xf32>
    %25 = vector.broadcast %17 : vector<16x1xf32> to vector<16x512xf32>
    %26 = arith.maximumf %24, %25 : vector<16x512xf32>
    %27 = arith.subf %23, %26 : vector<16x512xf32>
    %cst_15 = arith.constant 0.000000e+00 : f32
    %28 = vector.broadcast %cst_15 : f32 to vector<16x512xf32>
    %29 = arith.maximumf %27, %28 : vector<16x512xf32>
    %30 = vector.broadcast %11 : vector<1x512xf32> to vector<16x512xf32>
    %31 = vector.broadcast %20 : vector<16x1xf32> to vector<16x512xf32>
    %32 = arith.minimumf %30, %31 : vector<16x512xf32>
    %33 = vector.broadcast %9 : vector<1x512xf32> to vector<16x512xf32>
    %34 = vector.broadcast %18 : vector<16x1xf32> to vector<16x512xf32>
    %35 = arith.maximumf %33, %34 : vector<16x512xf32>
    %36 = arith.subf %32, %35 : vector<16x512xf32>
    %cst_16 = arith.constant 0.000000e+00 : f32
    %37 = vector.broadcast %cst_16 : f32 to vector<16x512xf32>
    %38 = arith.maximumf %36, %37 : vector<16x512xf32>
    %39 = arith.mulf %29, %38 : vector<16x512xf32>
    %40 = arith.subf %10, %8 : vector<1x512xf32>
    %41 = arith.subf %11, %9 : vector<1x512xf32>
    %42 = arith.mulf %40, %41 : vector<1x512xf32>
    %43 = arith.subf %19, %17 : vector<16x1xf32>
    %44 = arith.subf %20, %18 : vector<16x1xf32>
    %45 = arith.mulf %43, %44 : vector<16x1xf32>
    %46 = vector.broadcast %42 : vector<1x512xf32> to vector<16x512xf32>
    %47 = vector.broadcast %45 : vector<16x1xf32> to vector<16x512xf32>
    %48 = arith.addf %46, %47 : vector<16x512xf32>
    %49 = arith.subf %48, %39 : vector<16x512xf32>
    %50 = arith.divf %39, %49 : vector<16x512xf32>
    %c0_17 = arith.constant 0 : index
    %c0_18 = arith.constant 0 : index
    %51 = vector.load %arg4[%c0_17, %c0_18] : memref<16x512xf32, #tpu.memory_space<vmem>>, vector<16x512xf32>
    tpu.vector_store %arg4[%c0_17, %c0_18], %50 {strides = array<i32>} : memref<16x512xf32, #tpu.memory_space<vmem>>, vector<16x512xf32>,
    return
  }
  func.func @transform_0(%arg0: i32) -> (i32, i32) {
    %c0_i32 = arith.constant 0 : i32
    %c0_i32_0 = arith.constant 0 : i32
    %c0_i32_1 = arith.constant 0 : i32
    return %c0_i32, %c0_i32_0 : i32, i32
  }
  func.func @transform_1(%arg0: i32) -> (i32, i32) {
    %c0_i32 = arith.constant 0 : i32
    %c0_i32_0 = arith.constant 0 : i32
    %c0_i32_1 = arith.constant 0 : i32
    return %c0_i32, %c0_i32_0 : i32, i32
  }
  func.func @transform_2(%arg0: i32) -> (i32, i32) {
    %c0_i32 = arith.constant 0 : i32
    %c0_i32_0 = arith.constant 0 : i32
    %c0_i32_1 = arith.constant 0 : i32
    return %c0_i32, %c0_i32_0 : i32, i32
  }
  func.func @transform_3(%arg0: i32) -> (i32, i32) {
    %c0_i32 = arith.constant 0 : i32
    %c0_i32_0 = arith.constant 0 : i32
    %c0_i32_1 = arith.constant 0 : i32
    return %c0_i32, %c0_i32_0 : i32, i32
  }
}

</mosaic_0001>

<llo_original>
// kernel: tpu_custom_call.1
$region0: #{tpu_custom_call.1}
  #allocation0 [shape = 'u32[]', space=smem, size = 0x4, offset = 0x4, fixed_abs, tag = 'smem constant byte address 0x4 - core index']
  #allocation1 [shape = 'u32[144,128]{1,0:T(1,128)}', space=vmem, size = 0x12000, scoped, tag = 'internal scratch']
  %s0 = inlined_call_operand.vmem [shape: f32[4,512], index: 0, kind: input, shape index: {}]
  %s1 = inlined_call_operand.vmem [shape: f32[16,5], index: 1, kind: input, shape index: {}]
  %s2 = inlined_call_operand.hbm [shape: f32[4,512], index: 2, kind: output, shape index: {0}]
  %s3 = inlined_call_operand.hbm [shape: f32[16,512], index: 3, kind: output, shape index: {1}]
  %4 = xla_tuple %s2, %s3
  %s5 = sld [smem:[#allocation0]]
  $region26: #{tpu_custom_call.1} parent=0
    _
  %s7 = ssub.s32 1, %s5
  %s8 = scalar_select 0, %s7, %s5
  $region1: #{tpu_custom_call.1} parent=0
    #allocation2 [shape = 'u8[8192]{0}', space=vmem, size = 0x2000, scoped, tag = 'output window, operand 0, single buffered']
    #allocation3 [shape = 's32[1]{0}', space=sflag, size = 0x4, scoped, tag = 'scoped memory for tpu_custom_call.1']
    #allocation4 [shape = 'u8[32768]{0}', space=vmem, size = 0x8000, scoped, tag = 'output window, operand 1, single buffered']
    #allocation5 [shape = 's32[1]{0}', space=sflag, size = 0x4, scoped, tag = 'scoped memory for tpu_custom_call.1']
    %9 = vsyncpa [#allocation3], 0
    %10 = vsyncpa [#allocation5], 0
    // Predicated region
    $region2: #{tpu_custom_call.1} parent=1 // pred_check
      _
    $region3: #{tpu_custom_call.1} parent=1 // pred_check_branch
      %12 = sbr.rel (0) target = $region5
    $region4: #{tpu_custom_call.1} parent=1 // pred_region
      _
    $region5: #{tpu_custom_call.1} parent=1 // pred_fallthru
      _
    // Predicated region
    $region6: #{tpu_custom_call.1} parent=1 // pred_check
      _
    $region7: #{tpu_custom_call.1} parent=1 // pred_check_branch
      %14 = sbr.rel (0) target = $region9
    $region8: #{tpu_custom_call.1} parent=1 // pred_region
      _
    $region9: #{tpu_custom_call.1} parent=1 // pred_fallthru
      _
    %v15 = vld [vmem:[%s0] ss:$4 sm:$0xf]
    %s16 = scalar_lea.vmem %s0, 1
    %v17 = vld [vmem:[%s16] ss:$4 sm:$0xf]
    %s18 = scalar_lea.vmem %s0, 2
    %v19 = vld [vmem:[%s18] ss:$4 sm:$0xf]
    %v20 = vmul.f32 %v19, 0.5
    %s21 = scalar_lea.vmem %s0, 3
    %v22 = vld [vmem:[%s21] ss:$4 sm:$0xf]
    %v23 = vmul.f32 %v22, 0.5
    %v24 = vsub.f32 %v15, %v20
    %v25 = vsub.f32 %v17, %v23
    %v26 = vadd.f32 %v15, %v20
    %v27 = vadd.f32 %v17, %v23
    %v28 = vlaneseq
    %vm29 = vcmp.ge.s32.totalorder %v28, 0
    %vm30 = vcmp.lt.s32.totalorder %v28, 512
    %vm31 = vmand %vm29, %vm30
    %32 = vst.msk [vmem:[#allocation2] ss:$4 sm:$0xf] %vm31, %v24
    %s33 = scalar_lea.vmem [#allocation2], 1
    %34 = vst.msk [vmem:[%s33] ss:$4 sm:$0xf] %vm31, %v25
    %s35 = scalar_lea.vmem [#allocation2], 2
    %36 = vst.msk [vmem:[%s35] ss:$4 sm:$0xf] %vm31, %v26
    %s37 = scalar_lea.vmem [#allocation2], 3
    %38 = vst.msk [vmem:[%s37] ss:$4 sm:$0xf] %vm31, %v27
    %v39 = vld [vmem:[%s1] sm:$0xff]
    %v40 = vld [vmem:[%s1 + $0x8] sm:$0xff]
    %v42 = vlaneseq
    %v43 = vshrl.u32 %v42, 7
    %v44 = vsub.s32 0, %v43
    %v45 = vrot.slane %v26, %v44
    %v46 = vlaneseq
    %v47 = vshrl.u32 %v46, 7
    %v48 = vsub.s32 1, %v47
    %v49 = vrot.slane %v26, %v48
    %v50 = vlaneseq
    %v51 = vshrl.u32 %v50, 7
    %v52 = vsub.s32 2, %v51
    %v53 = vrot.slane %v26, %v52
    %v54 = vlaneseq
    %v55 = vshrl.u32 %v54, 7
    %v56 = vsub.s32 3, %v55
    %v57 = vrot.slane %v26, %v56
    %63 = vset.pattern.permute.xlu0 2
    %64 = vperm.xlu0 %63, %v39
    %v65 = vpop.permute.xlu0 %64
    %68 = vset.pattern.permute.xlu0 2
    %69 = vperm.xlu0 %68, %v40
    %v70 = vpop.permute.xlu0 %69
    %v72 = vmin.f32 %v45, %v65
    %v73 = vmin.f32 %v49, %v65
    %v74 = vmin.f32 %v53, %v65
    %v75 = vmin.f32 %v57, %v65
    %v76 = vmin.f32 %v45, %v70
    %v77 = vmin.f32 %v49, %v70
    %v78 = vmin.f32 %v53, %v70
    %v79 = vmin.f32 %v57, %v70
    %v81 = vlaneseq
    %v82 = vshrl.u32 %v81, 7
    %v83 = vsub.s32 0, %v82
    %v84 = vrot.slane %v24, %v83
    %v85 = vlaneseq
    %v86 = vshrl.u32 %v85, 7
    %v87 = vsub.s32 1, %v86
    %v88 = vrot.slane %v24, %v87
    %v89 = vlaneseq
    %v90 = vshrl.u32 %v89, 7
    %v91 = vsub.s32 2, %v90
    %v92 = vrot.slane %v24, %v91
    %v93 = vlaneseq
    %v94 = vshrl.u32 %v93, 7
    %v95 = vsub.s32 3, %v94
    %v96 = vrot.slane %v24, %v95
    %101 = vset.pattern.permute.xlu0 0
    %102 = vperm.xlu0 %101, %v39
    %v103 = vpop.permute.xlu0 %102
    %105 = vset.pattern.permute.xlu0 0
    %106 = vperm.xlu0 %105, %v40
    %v107 = vpop.permute.xlu0 %106
    %v109 = vmax.f32 %v84, %v103
    %v110 = vmax.f32 %v88, %v103
    %v111 = vmax.f32 %v92, %v103
    %v112 = vmax.f32 %v96, %v103
    %v113 = vmax.f32 %v84, %v107
    %v114 = vmax.f32 %v88, %v107
    %v115 = vmax.f32 %v92, %v107
    %v116 = vmax.f32 %v96, %v107
    %v117 = vsub.f32 %v72, %v109
    %v118 = vsub.f32 %v73, %v110
    %v119 = vsub.f32 %v74, %v111
    %v120 = vsub.f32 %v75, %v112
    %v121 = vsub.f32 %v76, %v113
    %v122 = vsub.f32 %v77, %v114
    %v123 = vsub.f32 %v78, %v115
    %v124 = vsub.f32 %v79, %v116
    %v125 = vmax.f32 %v117, 0.0
    %v126 = vmax.f32 %v118, 0.0
    %v127 = vmax.f32 %v119, 0.0
    %v128 = vmax.f32 %v120, 0.0
    %v129 = vmax.f32 %v121, 0.0
    %v130 = vmax.f32 %v122, 0.0
    %v131 = vmax.f32 %v123, 0.0
    %v132 = vmax.f32 %v124, 0.0
    %v134 = vlaneseq
    %v135 = vshrl.u32 %v134, 7
    %v136 = vsub.s32 0, %v135
    %v137 = vrot.slane %v27, %v136
    %v138 = vlaneseq
    %v139 = vshrl.u32 %v138, 7
    %v140 = vsub.s32 1, %v139
    %v141 = vrot.slane %v27, %v140
    %v142 = vlaneseq
    %v143 = vshrl.u32 %v142, 7
    %v144 = vsub.s32 2, %v143
    %v145 = vrot.slane %v27, %v144
    %v146 = vlaneseq
    %v147 = vshrl.u32 %v146, 7
    %v148 = vsub.s32 3, %v147
    %v149 = vrot.slane %v27, %v148
    %154 = vset.pattern.permute.xlu0 3
    %155 = vperm.xlu0 %154, %v39
    %v156 = vpop.permute.xlu0 %155
    %158 = vset.pattern.permute.xlu0 3
    %159 = vperm.xlu0 %158, %v40
    %v160 = vpop.permute.xlu0 %159
    %v162 = vmin.f32 %v137, %v156
    %v163 = vmin.f32 %v141, %v156
    %v164 = vmin.f32 %v145, %v156
    %v165 = vmin.f32 %v149, %v156
    %v166 = vmin.f32 %v137, %v160
    %v167 = vmin.f32 %v141, %v160
    %v168 = vmin.f32 %v145, %v160
    %v169 = vmin.f32 %v149, %v160
    %v171 = vlaneseq
    %v172 = vshrl.u32 %v171, 7
    %v173 = vsub.s32 0, %v172
    %v174 = vrot.slane %v25, %v173
    %v175 = vlaneseq
    %v176 = vshrl.u32 %v175, 7
    %v177 = vsub.s32 1, %v176
    %v178 = vrot.slane %v25, %v177
    %v179 = vlaneseq
    %v180 = vshrl.u32 %v179, 7
    %v181 = vsub.s32 2, %v180
    %v182 = vrot.slane %v25, %v181
    %v183 = vlaneseq
    %v184 = vshrl.u32 %v183, 7
    %v185 = vsub.s32 3, %v184
    %v186 = vrot.slane %v25, %v185
    %191 = vset.pattern.permute.xlu0 1
    %192 = vperm.xlu0 %191, %v39
    %v193 = vpop.permute.xlu0 %192
    %195 = vset.pattern.permute.xlu0 1
    %196 = vperm.xlu0 %195, %v40
    %v197 = vpop.permute.xlu0 %196
    %v199 = vmax.f32 %v174, %v193
    %v200 = vmax.f32 %v178, %v193
    %v201 = vmax.f32 %v182, %v193
    %v202 = vmax.f32 %v186, %v193
    %v203 = vmax.f32 %v174, %v197
    %v204 = vmax.f32 %v178, %v197
    %v205 = vmax.f32 %v182, %v197
    %v206 = vmax.f32 %v186, %v197
    %v207 = vsub.f32 %v162, %v199
    %v208 = vsub.f32 %v163, %v200
    %v209 = vsub.f32 %v164, %v201
    %v210 = vsub.f32 %v165, %v202
    %v211 = vsub.f32 %v166, %v203
    %v212 = vsub.f32 %v167, %v204
    %v213 = vsub.f32 %v168, %v205
    %v214 = vsub.f32 %v169, %v206
    %v215 = vmax.f32 %v207, 0.0
    %v216 = vmax.f32 %v208, 0.0
    %v217 = vmax.f32 %v209, 0.0
    %v218 = vmax.f32 %v210, 0.0
    %v219 = vmax.f32 %v211, 0.0
    %v220 = vmax.f32 %v212, 0.0
    %v221 = vmax.f32 %v213, 0.0
    %v222 = vmax.f32 %v214, 0.0
    %v223 = vmul.f32 %v125, %v215
    %v224 = vmul.f32 %v126, %v216
    %v225 = vmul.f32 %v127, %v217
    %v226 = vmul.f32 %v128, %v218
    %v227 = vmul.f32 %v129, %v219
    %v228 = vmul.f32 %v130, %v220
    %v229 = vmul.f32 %v131, %v221
    %v230 = vmul.f32 %v132, %v222
    %v231 = vsub.f32 %v26, %v24
    %v232 = vsub.f32 %v27, %v25
    %v233 = vmul.f32 %v231, %v232
    %234 = vrot.lane.b32.xlu0 %v39, 2
    %v235 = vpop.permute.xlu0 %234
    %236 = vrot.lane.b32.xlu0 %v40, 2
    %v237 = vpop.permute.xlu0 %236
    %v240 = vsub.f32 %v39, %v235
    %v241 = vsub.f32 %v40, %v237
    %244 = vrot.lane.b32.xlu0 %v240, 127
    %v245 = vpop.permute.xlu0 %244
    %246 = vrot.lane.b32.xlu0 %v241, 127
    %v247 = vpop.permute.xlu0 %246
    %v250 = vmul.f32 %v240, %v245
    %v251 = vmul.f32 %v241, %v247
    %v253 = vlaneseq
    %v254 = vshrl.u32 %v253, 7
    %v255 = vsub.s32 0, %v254
    %v256 = vrot.slane %v233, %v255
    %v257 = vlaneseq
    %v258 = vshrl.u32 %v257, 7
    %v259 = vsub.s32 1, %v258
    %v260 = vrot.slane %v233, %v259
    %v261 = vlaneseq
    %v262 = vshrl.u32 %v261, 7
    %v263 = vsub.s32 2, %v262
    %v264 = vrot.slane %v233, %v263
    %v265 = vlaneseq
    %v266 = vshrl.u32 %v265, 7
    %v267 = vsub.s32 3, %v266
    %v268 = vrot.slane %v233, %v267
    %274 = vset.pattern.permute.xlu0 2
    %275 = vperm.xlu0 %274, %v250
    %v276 = vpop.permute.xlu0 %275
    %279 = vset.pattern.permute.xlu0 2
    %280 = vperm.xlu0 %279, %v251
    %v281 = vpop.permute.xlu0 %280
    %v283 = vadd.f32 %v256, %v276
    %v284 = vadd.f32 %v260, %v276
    %v285 = vadd.f32 %v264, %v276
    %v286 = vadd.f32 %v268, %v276
    %v287 = vadd.f32 %v256, %v281
    %v288 = vadd.f32 %v260, %v281
    %v289 = vadd.f32 %v264, %v281
    %v290 = vadd.f32 %v268, %v281
    %v291 = vsub.f32 %v283, %v223
    %v292 = vsub.f32 %v284, %v224
    %v293 = vsub.f32 %v285, %v225
    %v294 = vsub.f32 %v286, %v226
    %v295 = vsub.f32 %v287, %v227
    %v296 = vsub.f32 %v288, %v228
    %v297 = vsub.f32 %v289, %v229
    %v298 = vsub.f32 %v290, %v230
    %v299 = vrcp.pop %v291
    %v300 = vmul.f32 %v223, %v299
    %v301 = vrcp.pop %v292
    %v302 = vmul.f32 %v224, %v301
    %v303 = vrcp.pop %v293
    %v304 = vmul.f32 %v225, %v303
    %v305 = vrcp.pop %v294
    %v306 = vmul.f32 %v226, %v305
    %v307 = vrcp.pop %v295
    %v308 = vmul.f32 %v227, %v307
    %v309 = vrcp.pop %v296
    %v310 = vmul.f32 %v228, %v309
    %v311 = vrcp.pop %v297
    %v312 = vmul.f32 %v229, %v311
    %v313 = vrcp.pop %v298
    %v314 = vmul.f32 %v230, %v313
    %315 = vst [vmem:[#allocation4] sm:$0xff] %v300
    %316 = vst [vmem:[#allocation4 + $0x8] sm:$0xff] %v302
    %317 = vst [vmem:[#allocation4 + $0x10] sm:$0xff] %v304
    %318 = vst [vmem:[#allocation4 + $0x18] sm:$0xff] %v306
    %319 = vst [vmem:[#allocation4 + $0x20] sm:$0xff] %v308
    %320 = vst [vmem:[#allocation4 + $0x28] sm:$0xff] %v310
    %321 = vst [vmem:[#allocation4 + $0x30] sm:$0xff] %v312
    %322 = vst [vmem:[#allocation4 + $0x38] sm:$0xff] %v314
    // Predicated region
    $region10: #{tpu_custom_call.1} parent=1 // pred_check
      _
    $region11: #{tpu_custom_call.1} parent=1 // pred_check_branch
      %324 = sbr.rel (0) target = $region13
    $region12: #{tpu_custom_call.1} parent=1 // pred_region
      %s326 = ssub.s32 256, 256
      %327 = vsyncadd [#allocation3], %s326
      %s329 = sshll.u32 [#allocation2], 4
      %s330 = int_to_ptr.vmem [resolvable:$true] %s329
      %332 = dma.vmem_to_hbm [thread:$0]  %s330, 256, %s2, [#allocation3]
    $region13: #{tpu_custom_call.1} parent=1 // pred_fallthru
      _
    // Predicated region
    $region14: #{tpu_custom_call.1} parent=1 // pred_check
      _
    $region15: #{tpu_custom_call.1} parent=1 // pred_check_branch
      %334 = sbr.rel (0) target = $region17
    $region16: #{tpu_custom_call.1} parent=1 // pred_region
      %s336 = ssub.s32 1024, 1024
      %337 = vsyncadd [#allocation5], %s336
      %s338 = sshll.u32 [#allocation4], 4
      %s339 = int_to_ptr.vmem [resolvable:$true] %s338
      %344 = dma.vmem_to_hbm [thread:$0]  %s339, 1024, %s3, [#allocation5], 512, 512, 32
    $region17: #{tpu_custom_call.1} parent=1 // pred_fallthru
      _
    // Predicated region
    $region18: #{tpu_custom_call.1} parent=1 // pred_check
      _
    $region19: #{tpu_custom_call.1} parent=1 // pred_check_branch
      %346 = sbr.rel (0) target = $region21
    $region20: #{tpu_custom_call.1} parent=1 // pred_region
      %347 = dma.done [#allocation3], 256
    $region21: #{tpu_custom_call.1} parent=1 // pred_fallthru
      _
    // Predicated region
    $region22: #{tpu_custom_call.1} parent=1 // pred_check
      _
    $region23: #{tpu_custom_call.1} parent=1 // pred_check_branch
      %349 = sbr.rel (0) target = $region25
    $region24: #{tpu_custom_call.1} parent=1 // pred_region
      %350 = dma.done [#allocation5], 1024
    $region25: #{tpu_custom_call.1} parent=1 // pred_fallthru
      _
    %351 = vsyncpa [#allocation3], 1
    %352 = vsyncpa [#allocation5], 1

</llo_original>
